<compile_context>
chip_gen: v7x
topology: tpu7x:2x2x1
jax: 0.10.0
libtpu: 0.0.40
codegen_flags: <defaults>
</compile_context>

<pallas_src>
import functools

import jax
import jax.numpy as jnp
from jax.experimental import pallas as pl
from jax.experimental.pallas import tpu as pltpu


_MAX_BLOCK_ROWS = 8192
_DEFAULT_PHYSICAL_VMEM = 64 * 1024 * 1024   # conservative fallback (v7x per-TC VMEM)


def _physical_vmem_bytes() -> int:
    try:
        return int(pltpu.get_tpu_info().vmem_capacity_bytes)
    except Exception:
        return _DEFAULT_PHYSICAL_VMEM


def _bf16_vpu_ok() -> bool:
    # bf16 VALU exists on v6e/v7x; v5e (and older) promote bf16 to f32 on the VPU, so there
    # is no win (and the review asks to keep f32 arithmetic there).
    try:
        kind = jax.devices()[0].device_kind.lower()
        return ("v6" in kind) or ("v7" in kind)
    except Exception:
        return False


def _layernorm_kernel(x_ref, w_ref, b_ref, o_ref, *, eps: float, apply_in_bf16: bool):
    # x_ref/o_ref: (block_rows, d_model); w_ref / b_ref: (1, d_model).
    x = x_ref[...].astype(jnp.float32)
    mean = jnp.mean(x, axis=-1, keepdims=True)
    xc = x - mean
    var = jnp.mean(xc * xc, axis=-1, keepdims=True)
    inv_scale = jax.lax.rsqrt(var + eps)               # EUP rsqrt (free slot)
    if apply_in_bf16:
        # f32 statistics, bf16 apply: halves VALU ops/element (bf16 vreg = 2048 elems).
        y = (xc.astype(jnp.bfloat16)
             * inv_scale.astype(jnp.bfloat16)
             * w_ref[...].astype(jnp.bfloat16)
             + b_ref[...].astype(jnp.bfloat16))
    else:
        y = xc * inv_scale * w_ref[...].astype(jnp.float32) + b_ref[...].astype(jnp.float32)
    o_ref[...] = y.astype(o_ref.dtype)


def _sublane_pack(dtype) -> int:
    # Rows packed per sublane tile: 8 for 4-byte dtypes, 16 for bf16, 32 for 1-byte dtypes.
    return max(8, 32 // max(1, jnp.dtype(dtype).itemsize))


def _per_row_bytes(d_model: int, in_dtype, out_dtype) -> int:
    in_b = jnp.dtype(in_dtype).itemsize
    out_b = jnp.dtype(out_dtype).itemsize
    # Double-buffered input + output pipeline tiles, plus ~4 live f32 intermediates
    # (x, xc, xc*xc, y) the compiler typically keeps alive in the kernel body.
    return d_model * (2 * (in_b + out_b) + 4 * 4)


def _choose_block_rows(rows: int, d_model: int, in_dtype, out_dtype, budget: int) -> int:
    per_row = _per_row_bytes(d_model, in_dtype, out_dtype)
    params = 4 * d_model * 4                           # w + b f32 tiles (double-buffered)
    block_rows = min((budget - params) // max(per_row, 1), _MAX_BLOCK_ROWS)
    if block_rows >= rows:
        return rows                                    # single full-extent block (always legal)
    pack = max(_sublane_pack(in_dtype), _sublane_pack(out_dtype))
    return max(pack, (block_rows // pack) * pack)


def layernorm(resid: jax.Array, w: jax.Array, b: jax.Array, eps: float = 1e-5,
              block_rows: int | None = None) -> jax.Array:
    """LayerNorm over the last (d_model) axis.

    resid: (batch, pos, d_model);  w, b: (d_model,)
    """
    batch, pos, d_model = resid.shape
    rows = batch * pos
    x2d = resid.reshape(rows, d_model)
    w2d = w.reshape(1, d_model)
    b2d = b.reshape(1, d_model)

    physical_vmem = _physical_vmem_bytes()
    block_budget = (physical_vmem * 3) // 8            # ~37.5% of physical VMEM
    vmem_limit = (physical_vmem * 3) // 4              # ~75% of physical VMEM

    if block_rows is None:
        block_rows = _choose_block_rows(rows, d_model, resid.dtype, resid.dtype, block_budget)
    block_rows = min(block_rows, rows)

    # Guard: make the scoped limit genuinely bound the allocation even when per_row exceeds
    # the budget (huge d_model at the minimum sublane pack).
    est_bytes = block_rows * _per_row_bytes(d_model, resid.dtype, resid.dtype) + 4 * d_model * 4
    if est_bytes > vmem_limit:
        vmem_limit = min(int(est_bytes * 1.25) + (1 << 20), (physical_vmem * 9) // 10)

    apply_in_bf16 = bool(resid.dtype == jnp.bfloat16 and _bf16_vpu_ok())

    grid = (pl.cdiv(rows, block_rows),)   # no padding: last block is masked by Pallas
    kernel = functools.partial(_layernorm_kernel, eps=eps, apply_in_bf16=apply_in_bf16)

    out2d = pl.pallas_call(
        kernel,
        out_shape=jax.ShapeDtypeStruct((rows, d_model), resid.dtype),
        grid_spec=pltpu.PrefetchScalarGridSpec(
            num_scalar_prefetch=0,
            grid=grid,
            in_specs=[
                pl.BlockSpec((block_rows, d_model), lambda i: (i, 0)),
                pl.BlockSpec((1, d_model), lambda i: (0, 0)),   # constant index -> stays resident
                pl.BlockSpec((1, d_model), lambda i: (0, 0)),
            ],
            out_specs=pl.BlockSpec((block_rows, d_model), lambda i: (i, 0)),
        ),
        compiler_params=pltpu.CompilerParams(
            dimension_semantics=("parallel",),
            vmem_limit_bytes=int(vmem_limit),
        ),
    )(x2d, w2d, b2d)

    return out2d.reshape(batch, pos, d_model)


def layernorm_ref(resid, w, b, eps=1e-5):
    x = resid.astype(jnp.float32)
    mean = jnp.mean(x, axis=-1, keepdims=True)
    xc = x - mean
    scale = (jnp.mean(xc * xc, axis=-1, keepdims=True) + eps) ** 0.5
    return (xc / scale * w.astype(jnp.float32) + b.astype(jnp.float32)).astype(resid.dtype)


if __name__ == "__main__":
    # Config-equivalent hyperparameters (deterministic, in-script).
    d_model = 32
    init_range = 0.02
    ln_eps = 1e-5

    key = jax.random.PRNGKey(0)
    k_x, k_w, k_x2, k_x3 = jax.random.split(key, 4)
    w = init_range * jax.random.normal(k_w, (d_model,), dtype=jnp.float32)
    b = jnp.zeros((d_model,), dtype=jnp.float32)

    def check(resid, block_rows=None, atol=1e-5, rtol=1e-5):
        y = jax.block_until_ready(layernorm(resid, w, b, eps=ln_eps, block_rows=block_rows))
        y_ref = layernorm_ref(resid, w, b, eps=ln_eps)
        assert y.shape == resid.shape
        assert not bool(jnp.isnan(y.astype(jnp.float32)).any())
        assert bool(jnp.allclose(y.astype(jnp.float32), y_ref.astype(jnp.float32),
                                 atol=atol, rtol=rtol))

    # 1) Module-consistent shape (batch=2, pos=8, d_model=32): single full-extent block.
    resid = jax.random.normal(k_x, (2, 8, d_model), dtype=jnp.float32)
    check(resid)

    # 2) Multi-step grid with a write-masked partial last block (rows=14, block_rows=8),
    #    validating the no-pad / cdiv-grid path.
    resid2 = jax.random.normal(k_x2, (2, 7, d_model), dtype=jnp.float32)
    check(resid2, block_rows=8)

    # 3) bf16 I/O path (f32 statistics, bf16 apply on v6e/v7x; full f32 on v5e) with looser
    #    tolerance against the f32 reference.
    resid3 = jax.random.normal(k_x3, (2, 8, d_model), dtype=jnp.float32).astype(jnp.bfloat16)
    check(resid3, atol=1e-2, rtol=1e-2)

    print("KERNEL_OK")
</pallas_src>

<mosaic_0001>
module attributes {stable_mosaic.version = 11 : i64} {
  func.func @_layernorm_kernel(%arg0: i32, %arg1: memref<16x32xf32, #tpu.memory_space<vmem>>, %arg2: memref<1x32xf32, #tpu.memory_space<vmem>>, %arg3: memref<1x32xf32, #tpu.memory_space<vmem>>, %arg4: memref<16x32xf32, #tpu.memory_space<vmem>>) attributes {dimension_semantics = [#tpu.dimension_semantics<parallel>], iteration_bounds = array<i64: 1>, scalar_prefetch = 0 : i64, scratch_operands = 0 : i64, tpu.core_type = #tpu.core_type<tc>, window_params = [{transform_indices = @transform_0, window_bounds = array<i64: 16, 32>}, {pipeline_mode = #tpu.pipeline_mode<synchronous>, transform_indices = @transform_1, window_bounds = array<i64: 1, 32>}, {pipeline_mode = #tpu.pipeline_mode<synchronous>, transform_indices = @transform_2, window_bounds = array<i64: 1, 32>}, {transform_indices = @transform_3, window_bounds = array<i64: 16, 32>}]} {
    %c0 = arith.constant 0 : index
    %c0_0 = arith.constant 0 : index
    %0 = vector.load %arg1[%c0, %c0_0] : memref<16x32xf32, #tpu.memory_space<vmem>>, vector<16x32xf32>
    %cst = arith.constant dense<0.000000e+00> : vector<16xf32>
    %1 = vector.multi_reduction <add>, %0, %cst [1] : vector<16x32xf32> to vector<16xf32>
    %2 = vector.shape_cast %1 : vector<16xf32> to vector<16x1xf32>
    %cst_1 = arith.constant 3.200000e+01 : f32
    %3 = vector.broadcast %cst_1 : f32 to vector<16x1xf32>
    %4 = arith.divf %2, %3 : vector<16x1xf32>
    %5 = vector.broadcast %4 : vector<16x1xf32> to vector<16x32xf32>
    %6 = arith.subf %0, %5 : vector<16x32xf32>
    %7 = arith.mulf %6, %6 : vector<16x32xf32>
    %cst_2 = arith.constant dense<0.000000e+00> : vector<16xf32>
    %8 = vector.multi_reduction <add>, %7, %cst_2 [1] : vector<16x32xf32> to vector<16xf32>
    %9 = vector.shape_cast %8 : vector<16xf32> to vector<16x1xf32>
    %cst_3 = arith.constant 3.200000e+01 : f32
    %10 = vector.broadcast %cst_3 : f32 to vector<16x1xf32>
    %11 = arith.divf %9, %10 : vector<16x1xf32>
    %cst_4 = arith.constant 9.99999974E-6 : f32
    %12 = vector.broadcast %cst_4 : f32 to vector<16x1xf32>
    %13 = arith.addf %11, %12 : vector<16x1xf32>
    %14 = math.rsqrt %13 : vector<16x1xf32>
    %15 = vector.broadcast %14 : vector<16x1xf32> to vector<16x32xf32>
    %16 = arith.mulf %6, %15 : vector<16x32xf32>
    %c0_5 = arith.constant 0 : index
    %c0_6 = arith.constant 0 : index
    %17 = vector.load %arg2[%c0_5, %c0_6] : memref<1x32xf32, #tpu.memory_space<vmem>>, vector<1x32xf32>
    %18 = vector.broadcast %17 : vector<1x32xf32> to vector<16x32xf32>
    %19 = arith.mulf %16, %18 : vector<16x32xf32>
    %c0_7 = arith.constant 0 : index
    %c0_8 = arith.constant 0 : index
    %20 = vector.load %arg3[%c0_7, %c0_8] : memref<1x32xf32, #tpu.memory_space<vmem>>, vector<1x32xf32>
    %21 = vector.broadcast %20 : vector<1x32xf32> to vector<16x32xf32>
    %22 = arith.addf %19, %21 : vector<16x32xf32>
    %c0_9 = arith.constant 0 : index
    %c0_10 = arith.constant 0 : index
    %23 = vector.load %arg4[%c0_9, %c0_10] : memref<16x32xf32, #tpu.memory_space<vmem>>, vector<16x32xf32>
    tpu.vector_store %arg4[%c0_9, %c0_10], %22 {strides = array<i32>} : memref<16x32xf32, #tpu.memory_space<vmem>>, vector<16x32xf32>,
    return
  }
  func.func @transform_0(%arg0: i32) -> (i32, i32) {
    %c0_i32 = arith.constant 0 : i32
    %c0_i32_0 = arith.constant 0 : i32
    return %arg0, %c0_i32 : i32, i32
  }
  func.func @transform_1(%arg0: i32) -> (i32, i32) {
    %c0_i32 = arith.constant 0 : i32
    %c0_i32_0 = arith.constant 0 : i32
    %c0_i32_1 = arith.constant 0 : i32
    return %c0_i32, %c0_i32_0 : i32, i32
  }
  func.func @transform_2(%arg0: i32) -> (i32, i32) {
    %c0_i32 = arith.constant 0 : i32
    %c0_i32_0 = arith.constant 0 : i32
    %c0_i32_1 = arith.constant 0 : i32
    return %c0_i32, %c0_i32_0 : i32, i32
  }
  func.func @transform_3(%arg0: i32) -> (i32, i32) {
    %c0_i32 = arith.constant 0 : i32
    %c0_i32_0 = arith.constant 0 : i32
    return %arg0, %c0_i32 : i32, i32
  }
}

</mosaic_0001>

<llo_original>
// kernel: tpu_custom_call.1
$region0: #{tpu_custom_call.1}
  #allocation0 [shape = 'u32[]', space=smem, size = 0x4, offset = 0x4, fixed_abs, tag = 'smem constant byte address 0x4 - core index']
  #allocation1 [shape = 'u32[144,128]{1,0:T(1,128)}', space=vmem, size = 0x12000, scoped, tag = 'internal scratch']
  %s0 = inlined_call_operand.hbm [shape: f32[16,32], index: 0, kind: input, shape index: {}]
  %s1 = inlined_call_operand.vmem [shape: f32[1,32], index: 1, kind: input, shape index: {}]
  %s2 = inlined_call_operand.vmem [shape: f32[1,32], index: 2, kind: input, shape index: {}]
  %s3 = inlined_call_operand.hbm [shape: f32[16,32], index: 3, kind: output, shape index: {}]
  %s4 = sld [smem:[#allocation0]]
  $region26: #{tpu_custom_call.1} parent=0
    _
  %s6 = ssub.s32 1, %s4
  %s7 = scalar_select 0, %s6, %s4
  $region1: #{tpu_custom_call.1} parent=0
    #allocation2 [shape = 'u8[8192]{0}', space=vmem, size = 0x2000, scoped, tag = 'input window, operand 0, single buffered']
    #allocation3 [shape = 's32[1]{0}', space=sflag, size = 0x4, scoped, tag = 'scoped memory for tpu_custom_call.1']
    #allocation4 [shape = 's32[1]{0}', space=sflag, size = 0x4, scoped, tag = 'scoped memory for tpu_custom_call.1']
    #allocation5 [shape = 'u8[8192]{0}', space=vmem, size = 0x2000, scoped, tag = 'output window, operand 0, single buffered']
    %8 = vsyncpa [#allocation3], 0
    %9 = vsyncpa [#allocation4], 0
    // Predicated region
    $region2: #{tpu_custom_call.1} parent=1 // pred_check
      _
    $region3: #{tpu_custom_call.1} parent=1 // pred_check_branch
      %11 = sbr.rel (0) target = $region5
    $region4: #{tpu_custom_call.1} parent=1 // pred_region
      %s13 = ssub.s32 256, 256
      %14 = vsyncadd [#allocation3], %s13
      %s15 = sshll.u32 [#allocation2], 4
      %s16 = int_to_ptr.vmem [resolvable:$true] %s15
      %21 = dma.hbm_to_vmem [thread:$0]  %s0, 256, %s16, [#allocation3], 128, 128, 8
    $region5: #{tpu_custom_call.1} parent=1 // pred_fallthru
      _
    // Predicated region
    $region6: #{tpu_custom_call.1} parent=1 // pred_check
      _
    $region7: #{tpu_custom_call.1} parent=1 // pred_check_branch
      %23 = sbr.rel (0) target = $region9
    $region8: #{tpu_custom_call.1} parent=1 // pred_region
      _
    $region9: #{tpu_custom_call.1} parent=1 // pred_fallthru
      _
    // Predicated region
    $region10: #{tpu_custom_call.1} parent=1 // pred_check
      _
    $region11: #{tpu_custom_call.1} parent=1 // pred_check_branch
      %25 = sbr.rel (0) target = $region13
    $region12: #{tpu_custom_call.1} parent=1 // pred_region
      _
    $region13: #{tpu_custom_call.1} parent=1 // pred_fallthru
      _
    // Predicated region
    $region14: #{tpu_custom_call.1} parent=1 // pred_check
      _
    $region15: #{tpu_custom_call.1} parent=1 // pred_check_branch
      %27 = sbr.rel (0) target = $region17
    $region16: #{tpu_custom_call.1} parent=1 // pred_region
      %28 = dma.done [#allocation3], 256
    $region17: #{tpu_custom_call.1} parent=1 // pred_fallthru
      _
    %v29 = vld [vmem:[#allocation2] sm:$0xff]
    %v30 = vld [vmem:[#allocation2 + $0x8] sm:$0xff]
    %vm31 = vcmask 261120
    %v32 = vsel %vm31, %v29, 0.0
    %33 = vadd.xlane.f32.xlu0 %v32
    %v34 = vpop.xlane.xlu0 %33
    %v35 = vsel %vm31, %v30, 0.0
    %36 = vadd.xlane.f32.xlu0 %v35
    %v37 = vpop.xlane.xlu0 %36
    %v38 = vrcp.pop 32.0
    %v39 = vmul.f32 %v34, %v38
    %v40 = vmul.f32 %v37, %v38
    %v41 = vsub.f32 %v29, %v39
    %v42 = vsub.f32 %v30, %v40
    %v43 = vmul.f32 %v41, %v41
    %v44 = vmul.f32 %v42, %v42
    %v45 = vsel %vm31, %v43, 0.0
    %46 = vadd.xlane.f32.xlu0 %v45
    %v47 = vpop.xlane.xlu0 %46
    %v48 = vsel %vm31, %v44, 0.0
    %49 = vadd.xlane.f32.xlu0 %v48
    %v50 = vpop.xlane.xlu0 %49
    %v51 = vmul.f32 %v47, %v38
    %v52 = vmul.f32 %v50, %v38
    %v53 = vadd.f32 %v51, 1e-05
    %v54 = vadd.f32 %v52, 1e-05
    %v55 = vrsqrt.pop %v53
    %v56 = vrsqrt.pop %v54
    %v57 = vmul.f32 %v41, %v55
    %v58 = vmul.f32 %v42, %v56
    %v59 = vld [vmem:[%s1] sm:$0x1]
    %v61 = vlaneseq
    %v62 = vshrl.u32 %v61, 7
    %v63 = vsub.s32 0, %v62
    %v64 = vrot.slane %v59, %v63
    %v66 = vmul.f32 %v57, %v64
    %v67 = vmul.f32 %v58, %v64
    %v68 = vld [vmem:[%s2] sm:$0x1]
    %v70 = vlaneseq
    %v71 = vshrl.u32 %v70, 7
    %v72 = vsub.s32 0, %v71
    %v73 = vrot.slane %v68, %v72
    %v75 = vadd.f32 %v66, %v73
    %v76 = vadd.f32 %v67, %v73
    %77 = vst.msk [vmem:[#allocation5] sm:$0xff] %vm31, %v75
    %78 = vst.msk [vmem:[#allocation5 + $0x8] sm:$0xff] %vm31, %v76
    // Predicated region
    $region18: #{tpu_custom_call.1} parent=1 // pred_check
      _
    $region19: #{tpu_custom_call.1} parent=1 // pred_check_branch
      %80 = sbr.rel (0) target = $region21
    $region20: #{tpu_custom_call.1} parent=1 // pred_region
      %s82 = ssub.s32 256, 256
      %83 = vsyncadd [#allocation4], %s82
      %s84 = sshll.u32 [#allocation5], 4
      %s85 = int_to_ptr.vmem [resolvable:$true] %s84
      %90 = dma.vmem_to_hbm [thread:$0]  %s85, 256, %s3, [#allocation4], 128, 128, 8
    $region21: #{tpu_custom_call.1} parent=1 // pred_fallthru
      _
    // Predicated region
    $region22: #{tpu_custom_call.1} parent=1 // pred_check
      _
    $region23: #{tpu_custom_call.1} parent=1 // pred_check_branch
      %92 = sbr.rel (0) target = $region25
    $region24: #{tpu_custom_call.1} parent=1 // pred_region
      %93 = dma.done [#allocation4], 256
    $region25: #{tpu_custom_call.1} parent=1 // pred_fallthru
      _
    %94 = vsyncpa [#allocation3], 1
    %95 = vsyncpa [#allocation4], 1

</llo_original>
